<compile_context>
chip_gen: v6e
topology: v6e:2x2x1
jax: 0.10.0
libtpu: 0.0.40
codegen_flags: <defaults>
</compile_context>

<pallas_src>
import jax
import jax.numpy as jnp
from jax.experimental import pallas as pl
from jax.experimental.pallas import tpu as pltpu


# ----------------------------------------------------------------------------
# Pallas kernel: identity "forward" as one direct HBM->HBM DMA.
# No VMEM staging, no grid, TensorCore off the critical path.
# ----------------------------------------------------------------------------
def _hbm_copy_kernel(x_hbm, o_hbm, sem):
    cp = pltpu.make_async_copy(x_hbm, o_hbm, sem)
    cp.start()
    cp.wait()


def modelbase_forward(x: jax.Array, *, materialize_copy: bool = False) -> jax.Array:
    """ModelBase.forward (identity pass-through).

    Default: short-circuit — return x with no kernel and no HBM traffic
    (the fastest identity is no identity; also covers the donated case).

    materialize_copy=True: produce a *new* buffer with identical contents via
    a single Pallas-issued HBM->HBM DMA.  Works for arbitrary shapes/dtypes
    (no (8,128) BlockSpec constraint, no scoped-VMEM pressure on any TPU gen).
    """
    if not materialize_copy:
        return x
    if x.size == 0:
        return x

    total_bytes = x.size * jnp.dtype(x.dtype).itemsize

    return pl.pallas_call(
        _hbm_copy_kernel,
        out_shape=jax.ShapeDtypeStruct(x.shape, x.dtype),
        in_specs=[pl.BlockSpec(memory_space=pl.ANY)],   # raw HBM ref, no auto-DMA
        out_specs=pl.BlockSpec(memory_space=pl.ANY),    # raw HBM ref, written by DMA
        scratch_shapes=[pltpu.SemaphoreType.DMA],
        cost_estimate=pl.CostEstimate(
            flops=0,
            transcendentals=0,
            bytes_accessed=2 * total_bytes,
        ),
    )(x)


# ----------------------------------------------------------------------------
# Host-side ModelBase bookkeeping (build / layer registry / run), mirroring the
# PyTorch class.  No parameters exist in the base class itself.
# ----------------------------------------------------------------------------
class ModelBase:
    def __init__(self, *args, name=None, **kwargs):
        self.name = name
        self.layers = []
        self.layers_by_name = {}
        self.built = False
        self.args = args
        self.kwargs = kwargs
        self.run_placeholders = None

    def _build_sub(self, layer, name):
        if isinstance(layer, ModelBase):
            layer.name = name
            self.layers.append(layer)
            self.layers_by_name[layer.name] = layer

    def xor_list(self, lst1, lst2):
        return [v for v in lst1 + lst2 if v not in lst1 or v not in lst2]

    def on_build(self, *args, **kwargs):
        pass  # abstract in the base class

    def build(self):
        gen = self.on_build(*self.args, **self.kwargs)
        if isinstance(gen, type(iter([]))):
            for _ in gen:
                pass
        for attr_name in list(vars(self)):
            self._build_sub(vars(self)[attr_name], attr_name)
        self.built = True

    def get_layers(self):
        if not self.built:
            self.build()
        return self.layers

    def get_layer_by_name(self, name):
        return self.layers_by_name.get(name, None)

    def get_weights(self):
        if not self.built:
            self.build()
        return []  # base class registers no parameters

    def forward(self, x):
        # Base-class forward is abstract: identity.  Per the perf review the
        # identity is short-circuited (no kernel, no HBM traffic).
        return modelbase_forward(x)

    def __call__(self, x):
        if not self.built:
            self.build()
        return self.forward(x)

    def build_for_run(self, shapes_list):
        if not isinstance(shapes_list, list):
            raise ValueError("shapes_list must be a list.")
        self.run_placeholders = [jnp.zeros(sh, jnp.float32) for _, sh in shapes_list]
        self.run_output = self.__call__(self.run_placeholders[0])

    def run(self, inputs):
        if self.run_placeholders is None:
            raise Exception("Model didn't build for run.")
        if len(inputs) != len(self.run_placeholders):
            raise ValueError("len(inputs) != self.run_placeholders")
        return self.forward(inputs[0])


if __name__ == "__main__":
    key = jax.random.PRNGKey(0)
    # Small NCHW placeholder consistent with build_for_run usage.
    x = jax.random.normal(key, (2, 4, 16, 16), dtype=jnp.float32)

    model = ModelBase(name="modelbase")
    model.build_for_run([("x", (2, 4, 16, 16))])

    # 1) Registry-driven run(): base-class forward is the short-circuited
    #    identity (zero HBM traffic — the biggest win from the perf review).
    y = model.run([x])
    y = jax.block_until_ready(y)
    assert y.shape == x.shape and y.dtype == x.dtype
    assert bool(jnp.all(y == x))

    # 2) Run the Pallas kernel once: materialized copy via a single direct
    #    HBM->HBM DMA (memory_space=pl.ANY + make_async_copy).
    y2 = jax.block_until_ready(modelbase_forward(x, materialize_copy=True))
    assert y2.shape == x.shape and y2.dtype == x.dtype
    assert bool(jnp.all(y2 == x))

    # 3) Irregular shape (element count not a multiple of 128): handled by the
    #    same single-DMA path — no VMEM blocking, no masked-store fallback.
    z = jax.random.normal(jax.random.PRNGKey(1), (2, 3, 5, 7), dtype=jnp.float32)
    yz = jax.block_until_ready(modelbase_forward(z, materialize_copy=True))
    assert yz.shape == z.shape and bool(jnp.all(yz == z))

    print("KERNEL_OK")
</pallas_src>

<mosaic_0001>
module attributes {stable_mosaic.version = 11 : i64} {
  func.func @_hbm_copy_kernel(%arg0: memref<2x4x16x16xf32, #tpu.memory_space<any>>, %arg1: memref<2x4x16x16xf32, #tpu.memory_space<any>>, %arg2: memref<!tpu.dma_semaphore, #tpu.memory_space<semaphore_mem>>) attributes {dimension_semantics = [], scalar_prefetch = 0 : i64, scratch_operands = 1 : i64, tpu.core_type = #tpu.core_type<tc>} {
    tpu.enqueue_dma source(%arg0 : memref<2x4x16x16xf32, #tpu.memory_space<any>>) target(%arg1 : memref<2x4x16x16xf32, #tpu.memory_space<any>>) target_semaphore(%arg2 : memref<!tpu.dma_semaphore, #tpu.memory_space<semaphore_mem>>)
    tpu.wait_dma2 semaphore(%arg2 : memref<!tpu.dma_semaphore, #tpu.memory_space<semaphore_mem>>) src(%arg0 : memref<2x4x16x16xf32, #tpu.memory_space<any>>) dst(%arg1 : memref<2x4x16x16xf32, #tpu.memory_space<any>>)
    return
  }
}

</mosaic_0001>

<llo_original>
// kernel: tpu_custom_call.1
$region0: #{tpu_custom_call.1}
  #allocation0 [shape = 'u32[]', space=smem, size = 0x4, offset = 0x4, fixed_abs, tag = 'smem constant byte address 0x4 - core index']
  #allocation1 [shape = 'u32[144,128]{1,0:T(1,128)}', space=vmem, size = 0x12000, scoped, tag = 'internal scratch']
  #allocation2 [shape = 's32[1]{0}', space=sflag, size = 0x4, scoped, tag = 'scratch operand']
  #allocation3 [shape = 's32[]', space=sflag, size = 0x4, offset = 0, fixed_abs, tag = 'sflag constant byte address 0x0 - dummy sync flag']
  #allocation4 [shape = 'u32[0]{0}', space=smem, size = 0, offset = 0, fixed_abs, tag = 'smem constant byte address 0x0 - null']
  %s0 = inlined_call_operand.hbm [shape: f32[2,4,16,16], index: 0, kind: input, shape index: {}]
  %s1 = inlined_call_operand.hbm [shape: f32[2,4,16,16], index: 1, kind: output, shape index: {}]
  %s2 = sld [smem:[#allocation0]]
  $region2: #{tpu_custom_call.1} parent=0
    _
  %s4 = ssub.s32 1, %s2
  %s5 = scalar_select 0, %s4, %s2
  %s7 = sshll.u32 1, 14
  %s8 = sxor.u32 4294967295, %s7
  %12 = dma.general %s0, 2048, %s1, [#allocation2], 131072, [#allocation4], 0, 0
  %s13 = smul.u32 2, 4
  %s14 = smul.u32 %s13, 16
  %s15 = smul.u32 %s14, 1
  %s16 = sshll.u32 %s15, 4
  %17 = dma.done [#allocation2], %s16
  %18 = vsyncmov [#allocation2]
  %s19 = vpop.sfrf %18
  %p20 = scmp.eq.s32.totalorder %s19, 0
  %p21 = pneg %p20
  %23 = shalt.err (%p21)

</llo_original>
